<compile_context>
chip_gen: v7x
topology: tpu7x:2x2x1
jax: 0.10.0
libtpu: 0.0.40
codegen_flags: <defaults>
</compile_context>

<pallas_src>
import functools

import jax
import jax.numpy as jnp
from jax.experimental import pallas as pl
from jax.experimental.pallas import tpu as pltpu


def _conv1x1_clamp_kernel(x_ref, w_ref, b_ref, o_ref, *,
                          c_in, c_out, stride, padding,
                          h0, n_h, ho_lo, W, Ho, Wo,
                          clamp_min, clamp_max):
    """One batch image per grid step.

    x_ref : [1, c_in, H, W]    VMEM (raw NCHW input block)
    w_ref : [c_out, c_in]      SMEM scalars
    b_ref : [c_out]            SMEM scalars
    o_ref : [1, c_out, Ho, Wo] VMEM
    """
    f32 = jnp.float32

    # Gather the valid (non-padding) input rows h = h0 + r*stride and subsample their
    # columns w = wo*stride - padding, per input channel -> [n_h, Wo].  All offsets are
    # compile-time constants, so every access is a plain (static) slice: no gathers,
    # no lane-strided loads, no MXU.  Columns whose sample point lies in the zero
    # padding are filled with 0 so they become bias-only after the channel mix.
    xsel = []
    if n_h > 0:
        for c in range(c_in):
            rows = [x_ref[0, c, pl.ds(h0 + r * stride, 1), :] for r in range(n_h)]
            xc = (jnp.concatenate(rows, axis=0) if n_h > 1 else rows[0]).astype(f32)  # [n_h, W]
            cols = []
            for wo in range(Wo):
                w_src = wo * stride - padding
                if 0 <= w_src < W:
                    cols.append(xc[:, w_src:w_src + 1])            # static lane slice
                else:
                    cols.append(jnp.zeros((n_h, 1), f32))          # padding col -> bias only
            xsel.append(jnp.concatenate(cols, axis=1) if Wo > 1 else cols[0])  # [n_h, Wo]

    for o in range(c_out):
        b_o = b_ref[o].astype(f32)
        border = jnp.minimum(jnp.maximum(b_o, clamp_min), clamp_max)
        # Padding-border output rows/cols only see zero-padded input: conv == bias.
        # Fill the whole channel with clamp(bias), then overwrite the valid rows below.
        o_ref[0, o, :, :] = jnp.full((Ho, Wo), border, dtype=o_ref.dtype)

        if n_h == 0:
            continue
        # Whole-block VPU FMA channel mix + bias, then clamp_min -> clamp_max
        # (matches torch.clamp_min followed by torch.clamp_max, including the
        # degenerate min > max case).
        y = xsel[0] * w_ref[o, 0]
        for c in range(1, c_in):
            y = y + xsel[c] * w_ref[o, c]                          # [n_h, Wo]
        y = y + b_o
        y = jnp.minimum(jnp.maximum(y, clamp_min), clamp_max)
        o_ref[0, o, pl.ds(ho_lo, n_h), :] = y.astype(o_ref.dtype)  # direct sub-window store


def conv1x1_stride_pad_clamp(x, weight, bias, *, stride, padding,
                             clamp_min_val, clamp_max_val):
    B, Cin, H, W = x.shape
    Cout = weight.shape[0]
    Ho = (H + 2 * padding - 1) // stride + 1        # kernel_size = 1
    Wo = (W + 2 * padding - 1) // stride + 1

    # Output rows whose 1x1 sample point h = ho*stride - padding lies inside the input.
    ho_lo = -(-padding // stride)                                   # ceil(p / s)
    ho_hi = min(Ho - 1, (H - 1 + padding) // stride)
    n_h = max(0, ho_hi - ho_lo + 1)
    h0 = ho_lo * stride - padding                                   # first sampled input row

    w2d = weight.reshape(Cout, Cin).astype(jnp.float32)             # tiny -> SMEM scalars
    b1d = bias.reshape(Cout).astype(jnp.float32)

    kernel = functools.partial(
        _conv1x1_clamp_kernel,
        c_in=Cin, c_out=Cout, stride=stride, padding=padding,
        h0=h0, n_h=n_h, ho_lo=ho_lo, W=W, Ho=Ho, Wo=Wo,
        clamp_min=float(clamp_min_val),     # python floats: compile-time constants
        clamp_max=float(clamp_max_val),
    )

    return pl.pallas_call(
        kernel,
        out_shape=jax.ShapeDtypeStruct((B, Cout, Ho, Wo), x.dtype),
        grid=(B,),                                   # 2 steps -> shards across v7x's 2 TCs
        in_specs=[
            pl.BlockSpec((1, Cin, H, W), lambda b: (b, 0, 0, 0)),   # raw NCHW, one image/step
            pl.BlockSpec(memory_space=pltpu.MemorySpace.SMEM),      # weights  [Cout, Cin]
            pl.BlockSpec(memory_space=pltpu.MemorySpace.SMEM),      # bias     [Cout]
        ],
        out_specs=pl.BlockSpec((1, Cout, Ho, Wo), lambda b: (b, 0, 0, 0)),
        compiler_params=pltpu.CompilerParams(
            dimension_semantics=("parallel",)),
    )(x, w2d, b1d)


if __name__ == "__main__":
    key = jax.random.PRNGKey(0)
    k_x, k_w, k_b = jax.random.split(key, 3)

    # Module: Conv2d(2, 4, kernel_size=1, stride=3, padding=1), clamp_min=1, clamp_max=0
    B, Cin, H, W = 2, 2, 16, 22
    Cout, stride, padding = 4, 3, 1
    x = jax.random.normal(k_x, (B, Cin, H, W), dtype=jnp.float32)
    weight = jax.random.normal(k_w, (Cout, Cin, 1, 1), dtype=jnp.float32) * 0.5
    bias = jax.random.normal(k_b, (Cout,), dtype=jnp.float32) * 0.1

    # Plain-JAX reference (pad + strided slice + einsum) — reference code only,
    # the kernel path never pads or slices the activations.
    Ho = (H + 2 * padding - 1) // stride + 1
    Wo = (W + 2 * padding - 1) // stride + 1
    xp = jnp.pad(x, ((0, 0), (0, 0), (padding, padding), (padding, padding)))
    xs = xp[:, :, ::stride, ::stride][:, :, :Ho, :Wo]
    conv_ref = jnp.einsum("bchw,oc->bohw", xs, weight.reshape(Cout, Cin)) \
        + bias.reshape(1, Cout, 1, 1)

    # 1) Exact module semantics: clamp_min(., 1) then clamp_max(., 0) (degenerate,
    #    output identically zero — matches torch).
    out = conv1x1_stride_pad_clamp(
        x, weight, bias, stride=stride, padding=padding,
        clamp_min_val=1.0, clamp_max_val=0.0)
    out = jax.block_until_ready(out)
    ref = jnp.minimum(jnp.maximum(conv_ref, 1.0), 0.0)
    assert out.shape == (B, Cout, Ho, Wo), out.shape
    assert jnp.allclose(out, ref, atol=1e-5), float(jnp.max(jnp.abs(out - ref)))

    # 2) Non-degenerate clamp bounds to exercise the conv+bias path numerically.
    out2 = conv1x1_stride_pad_clamp(
        x, weight, bias, stride=stride, padding=padding,
        clamp_min_val=-0.5, clamp_max_val=0.5)
    out2 = jax.block_until_ready(out2)
    ref2 = jnp.minimum(jnp.maximum(conv_ref, -0.5), 0.5)
    assert jnp.allclose(out2, ref2, atol=1e-5), \
        float(jnp.max(jnp.abs(out2 - ref2)))

    print("KERNEL_OK")
</pallas_src>

<mosaic_0001>
module attributes {stable_mosaic.version = 11 : i64} {
  func.func @_conv1x1_clamp_kernel(%arg0: i32, %arg1: memref<1x2x16x22xf32, #tpu.memory_space<vmem>>, %arg2: memref<4x2xf32, #tpu.memory_space<smem>>, %arg3: memref<4xf32, #tpu.memory_space<smem>>, %arg4: memref<1x4x6x8xf32, #tpu.memory_space<vmem>>) attributes {dimension_semantics = [#tpu.dimension_semantics<parallel>], iteration_bounds = array<i64: 2>, scalar_prefetch = 0 : i64, scratch_operands = 0 : i64, tpu.core_type = #tpu.core_type<tc>, window_params = [{transform_indices = @transform_0, window_bounds = array<i64: 1, 2, 16, 22>}, {transform_indices = @transform_1, window_bounds = array<i64: 4, 2>}, {transform_indices = @transform_2, window_bounds = array<i64: 4>}, {transform_indices = @transform_3, window_bounds = array<i64: 1, 4, 6, 8>}]} {
    %c0 = arith.constant 0 : index
    %c0_0 = arith.constant 0 : index
    %c2 = arith.constant 2 : index
    %c0_1 = arith.constant 0 : index
    %0 = vector.load %arg1[%c0, %c0_0, %c2, %c0_1] : memref<1x2x16x22xf32, #tpu.memory_space<vmem>>, vector<1x1x1x22xf32>
    %1 = vector.shape_cast %0 : vector<1x1x1x22xf32> to vector<1x22xf32>
    %c0_2 = arith.constant 0 : index
    %c0_3 = arith.constant 0 : index
    %c5 = arith.constant 5 : index
    %c0_4 = arith.constant 0 : index
    %2 = vector.load %arg1[%c0_2, %c0_3, %c5, %c0_4] : memref<1x2x16x22xf32, #tpu.memory_space<vmem>>, vector<1x1x1x22xf32>
    %3 = vector.shape_cast %2 : vector<1x1x1x22xf32> to vector<1x22xf32>
    %c0_5 = arith.constant 0 : index
    %c0_6 = arith.constant 0 : index
    %c8 = arith.constant 8 : index
    %c0_7 = arith.constant 0 : index
    %4 = vector.load %arg1[%c0_5, %c0_6, %c8, %c0_7] : memref<1x2x16x22xf32, #tpu.memory_space<vmem>>, vector<1x1x1x22xf32>
    %5 = vector.shape_cast %4 : vector<1x1x1x22xf32> to vector<1x22xf32>
    %c0_8 = arith.constant 0 : index
    %c0_9 = arith.constant 0 : index
    %c11 = arith.constant 11 : index
    %c0_10 = arith.constant 0 : index
    %6 = vector.load %arg1[%c0_8, %c0_9, %c11, %c0_10] : memref<1x2x16x22xf32, #tpu.memory_space<vmem>>, vector<1x1x1x22xf32>
    %7 = vector.shape_cast %6 : vector<1x1x1x22xf32> to vector<1x22xf32>
    %c0_11 = arith.constant 0 : index
    %c0_12 = arith.constant 0 : index
    %c14 = arith.constant 14 : index
    %c0_13 = arith.constant 0 : index
    %8 = vector.load %arg1[%c0_11, %c0_12, %c14, %c0_13] : memref<1x2x16x22xf32, #tpu.memory_space<vmem>>, vector<1x1x1x22xf32>
    %9 = vector.shape_cast %8 : vector<1x1x1x22xf32> to vector<1x22xf32>
    %10 = tpu.concatenate %1, %3, %5, %7, %9 in 0 : vector<1x22xf32>, vector<1x22xf32>, vector<1x22xf32>, vector<1x22xf32>, vector<1x22xf32> -> vector<5x22xf32>
    %cst = arith.constant 0.000000e+00 : f32
    %11 = vector.broadcast %cst : f32 to vector<5x1xf32>
    %12 = vector.extract_strided_slice %10 {offsets = [0, 2], sizes = [5, 1], strides = [1, 1]} : vector<5x22xf32> to vector<5x1xf32>
    %13 = vector.extract_strided_slice %10 {offsets = [0, 5], sizes = [5, 1], strides = [1, 1]} : vector<5x22xf32> to vector<5x1xf32>
    %14 = vector.extract_strided_slice %10 {offsets = [0, 8], sizes = [5, 1], strides = [1, 1]} : vector<5x22xf32> to vector<5x1xf32>
    %15 = vector.extract_strided_slice %10 {offsets = [0, 11], sizes = [5, 1], strides = [1, 1]} : vector<5x22xf32> to vector<5x1xf32>
    %16 = vector.extract_strided_slice %10 {offsets = [0, 14], sizes = [5, 1], strides = [1, 1]} : vector<5x22xf32> to vector<5x1xf32>
    %17 = vector.extract_strided_slice %10 {offsets = [0, 17], sizes = [5, 1], strides = [1, 1]} : vector<5x22xf32> to vector<5x1xf32>
    %18 = vector.extract_strided_slice %10 {offsets = [0, 20], sizes = [5, 1], strides = [1, 1]} : vector<5x22xf32> to vector<5x1xf32>
    %19 = tpu.concatenate %11, %12, %13, %14, %15, %16, %17, %18 in 1 : vector<5x1xf32>, vector<5x1xf32>, vector<5x1xf32>, vector<5x1xf32>, vector<5x1xf32>, vector<5x1xf32>, vector<5x1xf32>, vector<5x1xf32> -> vector<5x8xf32>
    %c0_14 = arith.constant 0 : index
    %c1 = arith.constant 1 : index
    %c2_15 = arith.constant 2 : index
    %c0_16 = arith.constant 0 : index
    %20 = vector.load %arg1[%c0_14, %c1, %c2_15, %c0_16] : memref<1x2x16x22xf32, #tpu.memory_space<vmem>>, vector<1x1x1x22xf32>
    %21 = vector.shape_cast %20 : vector<1x1x1x22xf32> to vector<1x22xf32>
    %c0_17 = arith.constant 0 : index
    %c1_18 = arith.constant 1 : index
    %c5_19 = arith.constant 5 : index
    %c0_20 = arith.constant 0 : index
    %22 = vector.load %arg1[%c0_17, %c1_18, %c5_19, %c0_20] : memref<1x2x16x22xf32, #tpu.memory_space<vmem>>, vector<1x1x1x22xf32>
    %23 = vector.shape_cast %22 : vector<1x1x1x22xf32> to vector<1x22xf32>
    %c0_21 = arith.constant 0 : index
    %c1_22 = arith.constant 1 : index
    %c8_23 = arith.constant 8 : index
    %c0_24 = arith.constant 0 : index
    %24 = vector.load %arg1[%c0_21, %c1_22, %c8_23, %c0_24] : memref<1x2x16x22xf32, #tpu.memory_space<vmem>>, vector<1x1x1x22xf32>
    %25 = vector.shape_cast %24 : vector<1x1x1x22xf32> to vector<1x22xf32>
    %c0_25 = arith.constant 0 : index
    %c1_26 = arith.constant 1 : index
    %c11_27 = arith.constant 11 : index
    %c0_28 = arith.constant 0 : index
    %26 = vector.load %arg1[%c0_25, %c1_26, %c11_27, %c0_28] : memref<1x2x16x22xf32, #tpu.memory_space<vmem>>, vector<1x1x1x22xf32>
    %27 = vector.shape_cast %26 : vector<1x1x1x22xf32> to vector<1x22xf32>
    %c0_29 = arith.constant 0 : index
    %c1_30 = arith.constant 1 : index
    %c14_31 = arith.constant 14 : index
    %c0_32 = arith.constant 0 : index
    %28 = vector.load %arg1[%c0_29, %c1_30, %c14_31, %c0_32] : memref<1x2x16x22xf32, #tpu.memory_space<vmem>>, vector<1x1x1x22xf32>
    %29 = vector.shape_cast %28 : vector<1x1x1x22xf32> to vector<1x22xf32>
    %30 = tpu.concatenate %21, %23, %25, %27, %29 in 0 : vector<1x22xf32>, vector<1x22xf32>, vector<1x22xf32>, vector<1x22xf32>, vector<1x22xf32> -> vector<5x22xf32>
    %cst_33 = arith.constant 0.000000e+00 : f32
    %31 = vector.broadcast %cst_33 : f32 to vector<5x1xf32>
    %32 = vector.extract_strided_slice %30 {offsets = [0, 2], sizes = [5, 1], strides = [1, 1]} : vector<5x22xf32> to vector<5x1xf32>
    %33 = vector.extract_strided_slice %30 {offsets = [0, 5], sizes = [5, 1], strides = [1, 1]} : vector<5x22xf32> to vector<5x1xf32>
    %34 = vector.extract_strided_slice %30 {offsets = [0, 8], sizes = [5, 1], strides = [1, 1]} : vector<5x22xf32> to vector<5x1xf32>
    %35 = vector.extract_strided_slice %30 {offsets = [0, 11], sizes = [5, 1], strides = [1, 1]} : vector<5x22xf32> to vector<5x1xf32>
    %36 = vector.extract_strided_slice %30 {offsets = [0, 14], sizes = [5, 1], strides = [1, 1]} : vector<5x22xf32> to vector<5x1xf32>
    %37 = vector.extract_strided_slice %30 {offsets = [0, 17], sizes = [5, 1], strides = [1, 1]} : vector<5x22xf32> to vector<5x1xf32>
    %38 = vector.extract_strided_slice %30 {offsets = [0, 20], sizes = [5, 1], strides = [1, 1]} : vector<5x22xf32> to vector<5x1xf32>
    %39 = tpu.concatenate %31, %32, %33, %34, %35, %36, %37, %38 in 1 : vector<5x1xf32>, vector<5x1xf32>, vector<5x1xf32>, vector<5x1xf32>, vector<5x1xf32>, vector<5x1xf32>, vector<5x1xf32>, vector<5x1xf32> -> vector<5x8xf32>
    %c0_34 = arith.constant 0 : index
    %40 = memref.load %arg3[%c0_34] : memref<4xf32, #tpu.memory_space<smem>>
    %cst_35 = arith.constant 1.000000e+00 : f32
    %41 = arith.maximumf %40, %cst_35 : f32
    %cst_36 = arith.constant 0.000000e+00 : f32
    %42 = arith.minimumf %41, %cst_36 : f32
    %43 = vector.broadcast %42 : f32 to vector<6x8xf32>
    %c0_37 = arith.constant 0 : index
    %c0_38 = arith.constant 0 : index
    %c0_39 = arith.constant 0 : index
    %c0_40 = arith.constant 0 : index
    %44 = vector.load %arg4[%c0_37, %c0_38, %c0_39, %c0_40] : memref<1x4x6x8xf32, #tpu.memory_space<vmem>>, vector<1x1x6x8xf32>
    %45 = vector.shape_cast %44 : vector<1x1x6x8xf32> to vector<6x8xf32>
    %46 = vector.shape_cast %43 : vector<6x8xf32> to vector<1x1x6x8xf32>
    tpu.vector_store %arg4[%c0_37, %c0_38, %c0_39, %c0_40], %46 {strides = array<i32>} : memref<1x4x6x8xf32, #tpu.memory_space<vmem>>, vector<1x1x6x8xf32>,
    %c0_41 = arith.constant 0 : index
    %c0_42 = arith.constant 0 : index
    %47 = memref.load %arg2[%c0_41, %c0_42] : memref<4x2xf32, #tpu.memory_space<smem>>
    %48 = vector.broadcast %47 : f32 to vector<5x8xf32>
    %49 = arith.mulf %19, %48 : vector<5x8xf32>
    %c0_43 = arith.constant 0 : index
    %c1_44 = arith.constant 1 : index
    %50 = memref.load %arg2[%c0_43, %c1_44] : memref<4x2xf32, #tpu.memory_space<smem>>
    %51 = vector.broadcast %50 : f32 to vector<5x8xf32>
    %52 = arith.mulf %39, %51 : vector<5x8xf32>
    %53 = arith.addf %49, %52 : vector<5x8xf32>
    %54 = vector.broadcast %40 : f32 to vector<5x8xf32>
    %55 = arith.addf %53, %54 : vector<5x8xf32>
    %cst_45 = arith.constant 1.000000e+00 : f32
    %56 = vector.broadcast %cst_45 : f32 to vector<5x8xf32>
    %57 = arith.maximumf %55, %56 : vector<5x8xf32>
    %cst_46 = arith.constant 0.000000e+00 : f32
    %58 = vector.broadcast %cst_46 : f32 to vector<5x8xf32>
    %59 = arith.minimumf %57, %58 : vector<5x8xf32>
    %c0_47 = arith.constant 0 : index
    %c0_48 = arith.constant 0 : index
    %c1_49 = arith.constant 1 : index
    %c0_50 = arith.constant 0 : index
    %60 = vector.load %arg4[%c0_47, %c0_48, %c1_49, %c0_50] : memref<1x4x6x8xf32, #tpu.memory_space<vmem>>, vector<1x1x5x8xf32>
    %61 = vector.shape_cast %60 : vector<1x1x5x8xf32> to vector<5x8xf32>
    %62 = vector.shape_cast %59 : vector<5x8xf32> to vector<1x1x5x8xf32>
    tpu.vector_store %arg4[%c0_47, %c0_48, %c1_49, %c0_50], %62 {strides = array<i32>} : memref<1x4x6x8xf32, #tpu.memory_space<vmem>>, vector<1x1x5x8xf32>,
    %c1_51 = arith.constant 1 : index
    %63 = memref.load %arg3[%c1_51] : memref<4xf32, #tpu.memory_space<smem>>
    %cst_52 = arith.constant 1.000000e+00 : f32
    %64 = arith.maximumf %63, %cst_52 : f32
    %cst_53 = arith.constant 0.000000e+00 : f32
    %65 = arith.minimumf %64, %cst_53 : f32
    %66 = vector.broadcast %65 : f32 to vector<6x8xf32>
    %c0_54 = arith.constant 0 : index
    %c1_55 = arith.constant 1 : index
    %c0_56 = arith.constant 0 : index
    %c0_57 = arith.constant 0 : index
    %67 = vector.load %arg4[%c0_54, %c1_55, %c0_56, %c0_57] : memref<1x4x6x8xf32, #tpu.memory_space<vmem>>, vector<1x1x6x8xf32>
    %68 = vector.shape_cast %67 : vector<1x1x6x8xf32> to vector<6x8xf32>
    %69 = vector.shape_cast %66 : vector<6x8xf32> to vector<1x1x6x8xf32>
    tpu.vector_store %arg4[%c0_54, %c1_55, %c0_56, %c0_57], %69 {strides = array<i32>} : memref<1x4x6x8xf32, #tpu.memory_space<vmem>>, vector<1x1x6x8xf32>,
    %c1_58 = arith.constant 1 : index
    %c0_59 = arith.constant 0 : index
    %70 = memref.load %arg2[%c1_58, %c0_59] : memref<4x2xf32, #tpu.memory_space<smem>>
    %71 = vector.broadcast %70 : f32 to vector<5x8xf32>
    %72 = arith.mulf %19, %71 : vector<5x8xf32>
    %c1_60 = arith.constant 1 : index
    %c1_61 = arith.constant 1 : index
    %73 = memref.load %arg2[%c1_60, %c1_61] : memref<4x2xf32, #tpu.memory_space<smem>>
    %74 = vector.broadcast %73 : f32 to vector<5x8xf32>
    %75 = arith.mulf %39, %74 : vector<5x8xf32>
    %76 = arith.addf %72, %75 : vector<5x8xf32>
    %77 = vector.broadcast %63 : f32 to vector<5x8xf32>
    %78 = arith.addf %76, %77 : vector<5x8xf32>
    %cst_62 = arith.constant 1.000000e+00 : f32
    %79 = vector.broadcast %cst_62 : f32 to vector<5x8xf32>
    %80 = arith.maximumf %78, %79 : vector<5x8xf32>
    %cst_63 = arith.constant 0.000000e+00 : f32
    %81 = vector.broadcast %cst_63 : f32 to vector<5x8xf32>
    %82 = arith.minimumf %80, %81 : vector<5x8xf32>
    %c0_64 = arith.constant 0 : index
    %c1_65 = arith.constant 1 : index
    %c1_66 = arith.constant 1 : index
    %c0_67 = arith.constant 0 : index
    %83 = vector.load %arg4[%c0_64, %c1_65, %c1_66, %c0_67] : memref<1x4x6x8xf32, #tpu.memory_space<vmem>>, vector<1x1x5x8xf32>
    %84 = vector.shape_cast %83 : vector<1x1x5x8xf32> to vector<5x8xf32>
    %85 = vector.shape_cast %82 : vector<5x8xf32> to vector<1x1x5x8xf32>
    tpu.vector_store %arg4[%c0_64, %c1_65, %c1_66, %c0_67], %85 {strides = array<i32>} : memref<1x4x6x8xf32, #tpu.memory_space<vmem>>, vector<1x1x5x8xf32>,
    %c2_68 = arith.constant 2 : index
    %86 = memref.load %arg3[%c2_68] : memref<4xf32, #tpu.memory_space<smem>>
    %cst_69 = arith.constant 1.000000e+00 : f32
    %87 = arith.maximumf %86, %cst_69 : f32
    %cst_70 = arith.constant 0.000000e+00 : f32
    %88 = arith.minimumf %87, %cst_70 : f32
    %89 = vector.broadcast %88 : f32 to vector<6x8xf32>
    %c0_71 = arith.constant 0 : index
    %c2_72 = arith.constant 2 : index
    %c0_73 = arith.constant 0 : index
    %c0_74 = arith.constant 0 : index
    %90 = vector.load %arg4[%c0_71, %c2_72, %c0_73, %c0_74] : memref<1x4x6x8xf32, #tpu.memory_space<vmem>>, vector<1x1x6x8xf32>
    %91 = vector.shape_cast %90 : vector<1x1x6x8xf32> to vector<6x8xf32>
    %92 = vector.shape_cast %89 : vector<6x8xf32> to vector<1x1x6x8xf32>
    tpu.vector_store %arg4[%c0_71, %c2_72, %c0_73, %c0_74], %92 {strides = array<i32>} : memref<1x4x6x8xf32, #tpu.memory_space<vmem>>, vector<1x1x6x8xf32>,
    %c2_75 = arith.constant 2 : index
    %c0_76 = arith.constant 0 : index
    %93 = memref.load %arg2[%c2_75, %c0_76] : memref<4x2xf32, #tpu.memory_space<smem>>
    %94 = vector.broadcast %93 : f32 to vector<5x8xf32>
    %95 = arith.mulf %19, %94 : vector<5x8xf32>
    %c2_77 = arith.constant 2 : index
    %c1_78 = arith.constant 1 : index
    %96 = memref.load %arg2[%c2_77, %c1_78] : memref<4x2xf32, #tpu.memory_space<smem>>
    %97 = vector.broadcast %96 : f32 to vector<5x8xf32>
    %98 = arith.mulf %39, %97 : vector<5x8xf32>
    %99 = arith.addf %95, %98 : vector<5x8xf32>
    %100 = vector.broadcast %86 : f32 to vector<5x8xf32>
    %101 = arith.addf %99, %100 : vector<5x8xf32>
    %cst_79 = arith.constant 1.000000e+00 : f32
    %102 = vector.broadcast %cst_79 : f32 to vector<5x8xf32>
    %103 = arith.maximumf %101, %102 : vector<5x8xf32>
    %cst_80 = arith.constant 0.000000e+00 : f32
    %104 = vector.broadcast %cst_80 : f32 to vector<5x8xf32>
    %105 = arith.minimumf %103, %104 : vector<5x8xf32>
    %c0_81 = arith.constant 0 : index
    %c2_82 = arith.constant 2 : index
    %c1_83 = arith.constant 1 : index
    %c0_84 = arith.constant 0 : index
    %106 = vector.load %arg4[%c0_81, %c2_82, %c1_83, %c0_84] : memref<1x4x6x8xf32, #tpu.memory_space<vmem>>, vector<1x1x5x8xf32>
    %107 = vector.shape_cast %106 : vector<1x1x5x8xf32> to vector<5x8xf32>
    %108 = vector.shape_cast %105 : vector<5x8xf32> to vector<1x1x5x8xf32>
    tpu.vector_store %arg4[%c0_81, %c2_82, %c1_83, %c0_84], %108 {strides = array<i32>} : memref<1x4x6x8xf32, #tpu.memory_space<vmem>>, vector<1x1x5x8xf32>,
    %c3 = arith.constant 3 : index
    %109 = memref.load %arg3[%c3] : memref<4xf32, #tpu.memory_space<smem>>
    %cst_85 = arith.constant 1.000000e+00 : f32
    %110 = arith.maximumf %109, %cst_85 : f32
    %cst_86 = arith.constant 0.000000e+00 : f32
    %111 = arith.minimumf %110, %cst_86 : f32
    %112 = vector.broadcast %111 : f32 to vector<6x8xf32>
    %c0_87 = arith.constant 0 : index
    %c3_88 = arith.constant 3 : index
    %c0_89 = arith.constant 0 : index
    %c0_90 = arith.constant 0 : index
    %113 = vector.load %arg4[%c0_87, %c3_88, %c0_89, %c0_90] : memref<1x4x6x8xf32, #tpu.memory_space<vmem>>, vector<1x1x6x8xf32>
    %114 = vector.shape_cast %113 : vector<1x1x6x8xf32> to vector<6x8xf32>
    %115 = vector.shape_cast %112 : vector<6x8xf32> to vector<1x1x6x8xf32>
    tpu.vector_store %arg4[%c0_87, %c3_88, %c0_89, %c0_90], %115 {strides = array<i32>} : memref<1x4x6x8xf32, #tpu.memory_space<vmem>>, vector<1x1x6x8xf32>,
    %c3_91 = arith.constant 3 : index
    %c0_92 = arith.constant 0 : index
    %116 = memref.load %arg2[%c3_91, %c0_92] : memref<4x2xf32, #tpu.memory_space<smem>>
    %117 = vector.broadcast %116 : f32 to vector<5x8xf32>
    %118 = arith.mulf %19, %117 : vector<5x8xf32>
    %c3_93 = arith.constant 3 : index
    %c1_94 = arith.constant 1 : index
    %119 = memref.load %arg2[%c3_93, %c1_94] : memref<4x2xf32, #tpu.memory_space<smem>>
    %120 = vector.broadcast %119 : f32 to vector<5x8xf32>
    %121 = arith.mulf %39, %120 : vector<5x8xf32>
    %122 = arith.addf %118, %121 : vector<5x8xf32>
    %123 = vector.broadcast %109 : f32 to vector<5x8xf32>
    %124 = arith.addf %122, %123 : vector<5x8xf32>
    %cst_95 = arith.constant 1.000000e+00 : f32
    %125 = vector.broadcast %cst_95 : f32 to vector<5x8xf32>
    %126 = arith.maximumf %124, %125 : vector<5x8xf32>
    %cst_96 = arith.constant 0.000000e+00 : f32
    %127 = vector.broadcast %cst_96 : f32 to vector<5x8xf32>
    %128 = arith.minimumf %126, %127 : vector<5x8xf32>
    %c0_97 = arith.constant 0 : index
    %c3_98 = arith.constant 3 : index
    %c1_99 = arith.constant 1 : index
    %c0_100 = arith.constant 0 : index
    %129 = vector.load %arg4[%c0_97, %c3_98, %c1_99, %c0_100] : memref<1x4x6x8xf32, #tpu.memory_space<vmem>>, vector<1x1x5x8xf32>
    %130 = vector.shape_cast %129 : vector<1x1x5x8xf32> to vector<5x8xf32>
    %131 = vector.shape_cast %128 : vector<5x8xf32> to vector<1x1x5x8xf32>
    tpu.vector_store %arg4[%c0_97, %c3_98, %c1_99, %c0_100], %131 {strides = array<i32>} : memref<1x4x6x8xf32, #tpu.memory_space<vmem>>, vector<1x1x5x8xf32>,
    return
  }
  func.func @transform_0(%arg0: i32) -> (i32, i32, i32, i32) {
    %c0_i32 = arith.constant 0 : i32
    %c0_i32_0 = arith.constant 0 : i32
    %c0_i32_1 = arith.constant 0 : i32
    %c0_i32_2 = arith.constant 0 : i32
    return %arg0, %c0_i32, %c0_i32_0, %c0_i32_1 : i32, i32, i32, i32
  }
  func.func @transform_1(%arg0: i32) -> (i32, i32) {
    %c0_i32 = arith.constant 0 : i32
    %c0_i32_0 = arith.constant 0 : i32
    %c0_i32_1 = arith.constant 0 : i32
    return %c0_i32, %c0_i32_0 : i32, i32
  }
  func.func @transform_2(%arg0: i32) -> i32 {
    %c0_i32 = arith.constant 0 : i32
    %c0_i32_0 = arith.constant 0 : i32
    return %c0_i32 : i32
  }
  func.func @transform_3(%arg0: i32) -> (i32, i32, i32, i32) {
    %c0_i32 = arith.constant 0 : i32
    %c0_i32_0 = arith.constant 0 : i32
    %c0_i32_1 = arith.constant 0 : i32
    %c0_i32_2 = arith.constant 0 : i32
    return %arg0, %c0_i32, %c0_i32_0, %c0_i32_1 : i32, i32, i32, i32
  }
}

</mosaic_0001>

<llo_original>
// kernel: tpu_custom_call.1
$region0: #{tpu_custom_call.1}
  #allocation0 [shape = 'u32[]', space=smem, size = 0x4, offset = 0x4, fixed_abs, tag = 'smem constant byte address 0x4 - core index']
  #allocation1 [shape = 'u32[144,128]{1,0:T(1,128)}', space=vmem, size = 0x12000, scoped, tag = 'internal scratch']
  %s0 = inlined_call_operand.hbm [shape: f32[2,2,16,22], index: 0, kind: input, shape index: {}]
  %s1 = inlined_call_operand.vmem [shape: f32[4,2], index: 1, kind: input, shape index: {}]
  %s2 = inlined_call_operand.vmem [shape: f32[4], index: 2, kind: input, shape index: {}]
  %s3 = inlined_call_operand.vmem [shape: f32[2,4,6,8], index: 3, kind: output, shape index: {}]
  %s4 = sld [smem:[#allocation0]]
  $region57: #{tpu_custom_call.1} parent=0
    _
  %s6 = ssub.s32 1, %s4
  %s7 = scalar_select 0, %s6, %s4
  $region1: #{tpu_custom_call.1} parent=0
    #allocation2 [shape = 'u8[32768]{0}', space=vmem, size = 0x8000, scoped, tag = 'input window, operand 0']
    #allocation3 [shape = 's32[2]{0}', space=sflag, size = 0x8, scoped, tag = 'scoped memory for tpu_custom_call.1']
    #allocation4 [shape = 's32[2]{0}', space=sflag, size = 0x8, scoped, tag = 'scoped memory for tpu_custom_call.1']
    #allocation5 [shape = 'u8[2048]{0}', space=smem, size = 0x800, scoped, tag = 'input window, operand 1, single buffered']
    #allocation6 [shape = 'u8[512]{0}', space=smem, size = 0x200, scoped, tag = 'input window, operand 2, single buffered']
    #allocation7 [shape = 's32[1]{0}', space=sflag, size = 0x4, scoped, tag = 'scoped memory for tpu_custom_call.1']
    %8 = vsyncpa [#allocation3], 0
    %s9 = scalar_lea.sflag [#allocation3], 1
    %10 = vsyncpa %s9, 0
    %11 = vsyncpa [#allocation4], 0
    %12 = vsyncpa [#allocation7], 0
    loop: start=0, step=1, limit=4
    $region2: #{tpu_custom_call.1} parent=1 // loop_pre_header
      _
    $region3: #{tpu_custom_call.1} parent=1 // loop_header
      %s14 = sphi 0, %s18
      %p15 = scmp.ge.s32.totalorder %s14, 4
      %s24 = sphi 0, %s26
      %s27 = sphi 0, %s24
      %s28 = sphi 0, %s27
      %s44 = sphi 0, %s28
      %s48 = sphi 0, %s48
      %s50 = sphi 0, %s48
      %s51 = sphi 0, %s50
      %s65 = sphi 0, %s51
      %s69 = sphi 0, %s69
      %s71 = sphi 0, %s69
      %s72 = sphi 0, %s71
      %s86 = sphi 0, %s72
      %s92 = sphi 0, %s94
      %s95 = sphi 0, %s92
      %s96 = sphi 0, %s95
      %s112 = sphi 0, %s96
    $region4: #{tpu_custom_call.1} parent=1 // loop_header_branch
      %17 = sbr.rel (%p15) target = $region8
    $region5: #{tpu_custom_call.1} parent=1 // loop_body
      %s19 = ssub.s32 %s14, 1
      %s20 = ssub.s32 %s14, 2
      %s21 = sadd.s32 %s14, 1
      %s22 = ssub.s32 %s14, %s21
      %p23 = scmp.eq.s32.totalorder %s22, 0
      %s25 = sadd.s32 %s24, 1
      %s26 = scalar_select %p23, %s24, %s25
      %p29 = pneg %p23
      %p30 = scmp.eq.s32.totalorder %s14, 1
      %p31 = por %p29, %p30
      %p32 = scmp.ne.s32.totalorder %s24, %s27
      %p33 = scmp.eq.s32.totalorder %s14, 0
      %p34 = por %p32, %p33
      %p35 = scmp.ne.s32.totalorder %s24, %s27
      %p36 = scmp.eq.s32.totalorder %s19, 1
      %p37 = por %p35, %p36
      %p38 = scmp.ne.s32.totalorder %s27, %s28
      %p39 = scmp.eq.s32.totalorder %s19, 0
      %p40 = por %p38, %p39
      %p41 = scmp.ne.s32.totalorder %s27, %s28
      %p42 = scmp.eq.s32.totalorder %s20, 1
      %p43 = por %p41, %p42
      %p45 = scmp.ne.s32.totalorder %s28, %s44
      %p46 = scmp.eq.s32.totalorder %s20, 0
      %p47 = por %p45, %p46
      %s49 = sadd.s32 %s48, 1
      %p52 = scmp.eq.s32.totalorder %s14, 1
      %p53 = scmp.ne.s32.totalorder %s48, %s50
      %p54 = scmp.eq.s32.totalorder %s14, 0
      %p55 = por %p53, %p54
      %p56 = scmp.ne.s32.totalorder %s48, %s50
      %p57 = scmp.eq.s32.totalorder %s19, 1
      %p58 = por %p56, %p57
      %p59 = scmp.ne.s32.totalorder %s50, %s51
      %p60 = scmp.eq.s32.totalorder %s19, 0
      %p61 = por %p59, %p60
      %p62 = scmp.ne.s32.totalorder %s50, %s51
      %p63 = scmp.eq.s32.totalorder %s20, 1
      %p64 = por %p62, %p63
      %p66 = scmp.ne.s32.totalorder %s51, %s65
      %p67 = scmp.eq.s32.totalorder %s20, 0
      %p68 = por %p66, %p67
      %s70 = sadd.s32 %s69, 1
      %p73 = scmp.eq.s32.totalorder %s14, 1
      %p74 = scmp.ne.s32.totalorder %s69, %s71
      %p75 = scmp.eq.s32.totalorder %s14, 0
      %p76 = por %p74, %p75
      %p77 = scmp.ne.s32.totalorder %s69, %s71
      %p78 = scmp.eq.s32.totalorder %s19, 1
      %p79 = por %p77, %p78
      %p80 = scmp.ne.s32.totalorder %s71, %s72
      %p81 = scmp.eq.s32.totalorder %s19, 0
      %p82 = por %p80, %p81
      %p83 = scmp.ne.s32.totalorder %s71, %s72
      %p84 = scmp.eq.s32.totalorder %s20, 1
      %p85 = por %p83, %p84
      %p87 = scmp.ne.s32.totalorder %s72, %s86
      %p88 = scmp.eq.s32.totalorder %s20, 0
      %p89 = por %p87, %p88
      %s90 = ssub.s32 %s14, %s21
      %p91 = scmp.eq.s32.totalorder %s90, 0
      %s93 = sadd.s32 %s92, 1
      %s94 = scalar_select %p91, %s92, %s93
      %p97 = pneg %p91
      %p98 = scmp.eq.s32.totalorder %s14, 1
      %p99 = por %p97, %p98
      %p100 = scmp.ne.s32.totalorder %s92, %s95
      %p101 = scmp.eq.s32.totalorder %s14, 0
      %p102 = por %p100, %p101
      %p103 = scmp.ne.s32.totalorder %s92, %s95
      %p104 = scmp.eq.s32.totalorder %s19, 1
      %p105 = por %p103, %p104
      %p106 = scmp.ne.s32.totalorder %s95, %s96
      %p107 = scmp.eq.s32.totalorder %s19, 0
      %p108 = por %p106, %p107
      %p109 = scmp.ne.s32.totalorder %s95, %s96
      %p110 = scmp.eq.s32.totalorder %s20, 1
      %p111 = por %p109, %p110
      %p113 = scmp.ne.s32.totalorder %s96, %s112
      %p114 = scmp.eq.s32.totalorder %s20, 0
      %p115 = por %p113, %p114
      %p116 = scmp.le.s32.totalorder 1, %s14
      %p117 = scmp.lt.s32.totalorder %s14, 3
      %p118 = pnand %p116, %p117
      %p119 = pneg %p118
      // Predicated region
      $region9: #{tpu_custom_call.1} parent=5 // pred_check
        _
      $region10: #{tpu_custom_call.1} parent=5 // pred_check_branch
        %121 = sbr.rel (%p118) target = $region12
      $region11: #{tpu_custom_call.1} parent=5 // pred_region
        %s122 = ssub.s32 %s14, 1
        // Predicated region
        $region13: #{tpu_custom_call.1} parent=11 // pred_check
          %p123 = pneg %p61
        $region14: #{tpu_custom_call.1} parent=11 // pred_check_branch
          %125 = sbr.rel (%p123) target = $region16
        $region15: #{tpu_custom_call.1} parent=11 // pred_region
          %s127 = ssub.s32 64, 64
          %128 = vsyncadd [#allocation4], %s127
          %s130 = sshll.u32 %s1, 4
          %s131 = int_to_ptr.vmem [resolvable:$true] %s130
          %133 = dma.vmem_to_smem %s131, 64, [#allocation5], [#allocation4]
        $region16: #{tpu_custom_call.1} parent=11 // pred_fallthru
          _
        // Predicated region
        $region17: #{tpu_custom_call.1} parent=11 // pred_check
          %p134 = pneg %p82
        $region18: #{tpu_custom_call.1} parent=11 // pred_check_branch
          %136 = sbr.rel (%p134) target = $region20
        $region19: #{tpu_custom_call.1} parent=11 // pred_region
          %s138 = ssub.s32 16, 16
          %139 = vsyncadd [#allocation7], %s138
          %s141 = sshll.u32 %s2, 4
          %s142 = int_to_ptr.vmem [resolvable:$true] %s141
          %144 = dma.vmem_to_smem %s142, 16, [#allocation6], [#allocation7]
        $region20: #{tpu_custom_call.1} parent=11 // pred_fallthru
          _
      $region12: #{tpu_custom_call.1} parent=5 // pred_fallthru
        _
      %p145 = scmp.lt.s32.totalorder %s14, 2
      // Predicated region
      $region21: #{tpu_custom_call.1} parent=5 // pred_check
        %p146 = pneg %p145
      $region22: #{tpu_custom_call.1} parent=5 // pred_check_branch
        %148 = sbr.rel (%p146) target = $region24
      $region23: #{tpu_custom_call.1} parent=5 // pred_region
        // Predicated region
        $region25: #{tpu_custom_call.1} parent=23 // pred_check
          %p149 = pneg %p34
        $region26: #{tpu_custom_call.1} parent=23 // pred_check_branch
          %151 = sbr.rel (%p149) target = $region28
        $region27: #{tpu_custom_call.1} parent=23 // pred_region
          %s152 = sand.u32 %s24, 1
          %s153 = scalar_lea.sflag [#allocation3], %s152
          %s154 = sand.u32 %s24, 1
          %s155 = smul.addr %s154, 32
          %s156 = scalar_lea.vmem [#allocation2], %s155
          %s158 = ssub.s32 512, 512
          %159 = vsyncadd %s153, %s158
          %s160 = smul.addr %s14, 4
          %s161 = smul.addr %s160, 128
          %s162 = scalar_lea.hbm %s0, %s161
          %s163 = sshll.u32 %s156, 4
          %s164 = int_to_ptr.vmem [resolvable:$true] %s163
          %169 = dma.hbm_to_vmem [thread:$0]  %s162, 512, %s164, %s153, 128, 128, 8
        $region28: #{tpu_custom_call.1} parent=23 // pred_fallthru
          _
      $region24: #{tpu_custom_call.1} parent=5 // pred_fallthru
        _
      %p170 = scmp.le.s32.totalorder 1, %s14
      %p171 = scmp.lt.s32.totalorder %s14, 3
      %p172 = pnand %p170, %p171
      %p173 = pneg %p172
      // Predicated region
      $region29: #{tpu_custom_call.1} parent=5 // pred_check
        _
      $region30: #{tpu_custom_call.1} parent=5 // pred_check_branch
        %175 = sbr.rel (%p172) target = $region32
      $region31: #{tpu_custom_call.1} parent=5 // pred_region
        %s176 = ssub.s32 %s14, 1
        %s177 = sand.u32 %s27, 1
        %s178 = scalar_lea.sflag [#allocation3], %s177
        %s179 = sand.u32 %s27, 1
        %s180 = smul.addr %s179, 32
        %s181 = scalar_lea.vmem [#allocation2], %s180
        // Predicated region
        $region33: #{tpu_custom_call.1} parent=31 // pred_check
          %p182 = pneg %p40
        $region34: #{tpu_custom_call.1} parent=31 // pred_check_branch
          %184 = sbr.rel (%p182) target = $region36
        $region35: #{tpu_custom_call.1} parent=31 // pred_region
          %185 = dma.done %s178, 512
        $region36: #{tpu_custom_call.1} parent=31 // pred_fallthru
          _
        // Predicated region
        $region37: #{tpu_custom_call.1} parent=31 // pred_check
          %p186 = pneg %p61
        $region38: #{tpu_custom_call.1} parent=31 // pred_check_branch
          %188 = sbr.rel (%p186) target = $region40
        $region39: #{tpu_custom_call.1} parent=31 // pred_region
          %189 = dma.done [#allocation4], 64
        $region40: #{tpu_custom_call.1} parent=31 // pred_fallthru
          _
        // Predicated region
        $region41: #{tpu_custom_call.1} parent=31 // pred_check
          %p190 = pneg %p82
        $region42: #{tpu_custom_call.1} parent=31 // pred_check_branch
          %192 = sbr.rel (%p190) target = $region44
        $region43: #{tpu_custom_call.1} parent=31 // pred_region
          %193 = dma.done [#allocation7], 16
        $region44: #{tpu_custom_call.1} parent=31 // pred_fallthru
          _
        %194 = sfence
        %s195 = sand.u32 %s27, 1
        %s196 = scalar_lea.sflag [#allocation3], %s195
        %s197 = sand.u32 %s27, 1
        %s198 = smul.addr %s197, 32
        %s199 = scalar_lea.vmem [#allocation2], %s198
        %p200 = pneg %p40
        %p201 = pneg %p37
        %p202 = pneg %p61
        %p203 = pneg %p58
        %p204 = pneg %p82
        %p205 = pneg %p79
        %p206 = pneg %p108
        %p207 = pneg %p105
        %p208 = scmp.lt.s32.totalorder %s19, 1
        %s209 = scalar_select %p208, %s19, 1
        %s210 = smul.addr %s209, 4
        %s211 = smul.addr %s210, 8
        %s212 = scalar_lea.vmem %s3, %s211
        %p213 = scmp.lt.s32.totalorder %s19, 1
        %s214 = scalar_select %p213, %s19, 1
        %s215 = smul.addr %s214, 4
        %s216 = smul.addr %s215, 8
        %s217 = scalar_lea.vmem %s3, %s216
        %v218 = vld [vmem:[%s181 + $0x2] sm:$0x1]
        %v219 = vld [vmem:[%s181 + $0x5] sm:$0x1]
        %v220 = vld [vmem:[%s181 + $0x8] sm:$0x1]
        %v221 = vld [vmem:[%s181 + $0xb] sm:$0x1]
        %v222 = vld [vmem:[%s181 + $0xe] sm:$0x1]
        %v224 = vrot.slane %v219, 7
        %v227 = vrot.slane %v220, 6
        %v230 = vrot.slane %v221, 5
        %v233 = vrot.slane %v222, 4
        %vm235 = vcmask 1040384
        %v236 = vsel %vm235, %v218, %v224
        %vm237 = vcmask 1041408
        %v238 = vsel %vm237, %v236, %v227
        %vm239 = vcmask 1042432
        %v240 = vsel %vm239, %v238, %v230
        %vm241 = vcmask 1043456
        %v242 = vsel %vm241, %v240, %v233
        %244 = vrot.lane.b32.xlu0 %v242, 127
        %v245 = vpop.permute.xlu0 %244
        %247 = vrot.lane.b32.xlu0 %v242, 125
        %v248 = vpop.permute.xlu0 %247
        %250 = vrot.lane.b32.xlu0 %v242, 123
        %v251 = vpop.permute.xlu0 %250
        %253 = vrot.lane.b32.xlu0 %v242, 121
        %v254 = vpop.permute.xlu0 %253
        %256 = vrot.lane.b32.xlu0 %v242, 119
        %v257 = vpop.permute.xlu0 %256
        %259 = vrot.lane.b32.xlu0 %v242, 117
        %v260 = vpop.permute.xlu0 %259
        %262 = vrot.lane.b32.xlu0 %v242, 115
        %v263 = vpop.permute.xlu0 %262
        %vm265 = vcmask 7168
        %v266 = vsel %vm265, 0.0, %v245
        %vm267 = vcmask 15360
        %v268 = vsel %vm267, %v266, %v248
        %vm269 = vcmask 23552
        %v270 = vsel %vm269, %v268, %v251
        %vm271 = vcmask 31744
        %v272 = vsel %vm271, %v270, %v254
        %vm273 = vcmask 39936
        %v274 = vsel %vm273, %v272, %v257
        %vm275 = vcmask 48128
        %v276 = vsel %vm275, %v274, %v260
        %vm277 = vcmask 56320
        %v278 = vsel %vm277, %v276, %v263
        %s279 = scalar_lea.vmem %s181, 16 [#allocation2]
        %v280 = vld [vmem:[%s279 + $0x2] sm:$0x1]
        %v281 = vld [vmem:[%s279 + $0x5] sm:$0x1]
        %v282 = vld [vmem:[%s279 + $0x8] sm:$0x1]
        %v283 = vld [vmem:[%s279 + $0xb] sm:$0x1]
        %v284 = vld [vmem:[%s279 + $0xe] sm:$0x1]
        %v286 = vrot.slane %v281, 7
        %v289 = vrot.slane %v282, 6
        %v292 = vrot.slane %v283, 5
        %v295 = vrot.slane %v284, 4
        %v297 = vsel %vm235, %v280, %v286
        %v298 = vsel %vm237, %v297, %v289
        %v299 = vsel %vm239, %v298, %v292
        %v300 = vsel %vm241, %v299, %v295
        %302 = vrot.lane.b32.xlu0 %v300, 127
        %v303 = vpop.permute.xlu0 %302
        %305 = vrot.lane.b32.xlu0 %v300, 125
        %v306 = vpop.permute.xlu0 %305
        %308 = vrot.lane.b32.xlu0 %v300, 123
        %v309 = vpop.permute.xlu0 %308
        %311 = vrot.lane.b32.xlu0 %v300, 121
        %v312 = vpop.permute.xlu0 %311
        %314 = vrot.lane.b32.xlu0 %v300, 119
        %v315 = vpop.permute.xlu0 %314
        %317 = vrot.lane.b32.xlu0 %v300, 117
        %v318 = vpop.permute.xlu0 %317
        %320 = vrot.lane.b32.xlu0 %v300, 115
        %v321 = vpop.permute.xlu0 %320
        %v323 = vsel %vm265, 0.0, %v303
        %v324 = vsel %vm267, %v323, %v306
        %v325 = vsel %vm269, %v324, %v309
        %v326 = vsel %vm271, %v325, %v312
        %v327 = vsel %vm273, %v326, %v315
        %v328 = vsel %vm275, %v327, %v318
        %v329 = vsel %vm277, %v328, %v321
        %s330 = sld [smem:[#allocation6]]
        %s331 = smax.f32 %s330, 1.0
        %s332 = smin.f32 %s331, 0.0
        %v333 = vstv %s332
        %vm334 = vcmask 62464
        %335 = vst.msk [vmem:[%s217] sm:$0x3f] %vm334, %v333
        %s336 = sld [smem:[#allocation5]]
        %v337 = vstv %s336
        %v338 = vmul.f32 %v278, %v337
        %s339 = sld [smem:[#allocation5 + $0x1]]
        %v340 = vstv %s339
        %v341 = vmul.f32 %v329, %v340
        %v342 = vadd.f32 %v338, %v341
        %v343 = vstv %s330
        %v344 = vadd.f32 %v342, %v343
        %v345 = vmax.f32 %v344, 1.0
        %v346 = vmin.f32 %v345, 0.0
        %vm347 = vcmask 61440
        %348 = vst.msk [vmem:[%s217 + $0x1] sm:$0x1f] %vm347, %v346
        %s349 = sld [smem:[#allocation6 + $0x1]]
        %s350 = smax.f32 %s349, 1.0
        %s351 = smin.f32 %s350, 0.0
        %v352 = vstv %s351
        %s353 = scalar_lea.vmem %s217, 8
        %354 = vst.msk [vmem:[%s353] sm:$0x3f] %vm334, %v352
        %s355 = sld [smem:[#allocation5 + $0x80]]
        %v356 = vstv %s355
        %v357 = vmul.f32 %v278, %v356
        %s358 = sld [smem:[#allocation5 + $0x81]]
        %v359 = vstv %s358
        %v360 = vmul.f32 %v329, %v359
        %v361 = vadd.f32 %v357, %v360
        %v362 = vstv %s349
        %v363 = vadd.f32 %v361, %v362
        %v364 = vmax.f32 %v363, 1.0
        %v365 = vmin.f32 %v364, 0.0
        %366 = vst.msk [vmem:[%s353 + $0x1] sm:$0x1f] %vm347, %v365
        %s367 = sld [smem:[#allocation6 + $0x2]]
        %s368 = smax.f32 %s367, 1.0
        %s369 = smin.f32 %s368, 0.0
        %v370 = vstv %s369
        %s371 = scalar_lea.vmem %s217, 16
        %372 = vst.msk [vmem:[%s371] sm:$0x3f] %vm334, %v370
        %s373 = sld [smem:[#allocation5 + $0x100]]
        %v374 = vstv %s373
        %v375 = vmul.f32 %v278, %v374
        %s376 = sld [smem:[#allocation5 + $0x101]]
        %v377 = vstv %s376
        %v378 = vmul.f32 %v329, %v377
        %v379 = vadd.f32 %v375, %v378
        %v380 = vstv %s367
        %v381 = vadd.f32 %v379, %v380
        %v382 = vmax.f32 %v381, 1.0
        %v383 = vmin.f32 %v382, 0.0
        %384 = vst.msk [vmem:[%s371 + $0x1] sm:$0x1f] %vm347, %v383
        %s385 = sld [smem:[#allocation6 + $0x3]]
        %s386 = smax.f32 %s385, 1.0
        %s387 = smin.f32 %s386, 0.0
        %v388 = vstv %s387
        %s389 = scalar_lea.vmem %s217, 24
        %390 = vst.msk [vmem:[%s389] sm:$0x3f] %vm334, %v388
        %s391 = sld [smem:[#allocation5 + $0x180]]
        %v392 = vstv %s391
        %v393 = vmul.f32 %v278, %v392
        %s394 = sld [smem:[#allocation5 + $0x181]]
        %v395 = vstv %s394
        %v396 = vmul.f32 %v329, %v395
        %v397 = vadd.f32 %v393, %v396
        %v398 = vstv %s385
        %v399 = vadd.f32 %v397, %v398
        %v400 = vmax.f32 %v399, 1.0
        %v401 = vmin.f32 %v400, 0.0
        %402 = vst.msk [vmem:[%s389 + $0x1] sm:$0x1f] %vm347, %v401
        %p403 = scmp.lt.s32.totalorder %s19, 1
        %s404 = scalar_select %p403, %s19, 1
        %s405 = smul.addr %s404, 4
        %s406 = smul.addr %s405, 8
        %s407 = scalar_lea.vmem %s3, %s406
        // Predicated region
        $region45: #{tpu_custom_call.1} parent=31 // pred_check
          %p408 = pneg %p105
        $region46: #{tpu_custom_call.1} parent=31 // pred_check_branch
          %410 = sbr.rel (%p408) target = $region48
        $region47: #{tpu_custom_call.1} parent=31 // pred_region
          _
        $region48: #{tpu_custom_call.1} parent=31 // pred_fallthru
          _
      $region32: #{tpu_custom_call.1} parent=5 // pred_fallthru
        _
      %p411 = scmp.le.s32.totalorder 2, %s14
      // Predicated region
      $region49: #{tpu_custom_call.1} parent=5 // pred_check
        %p412 = pneg %p411
      $region50: #{tpu_custom_call.1} parent=5 // pred_check_branch
        %414 = sbr.rel (%p412) target = $region52
      $region51: #{tpu_custom_call.1} parent=5 // pred_region
        %s415 = ssub.s32 %s14, 2
        // Predicated region
        $region53: #{tpu_custom_call.1} parent=51 // pred_check
          %p416 = pneg %p111
        $region54: #{tpu_custom_call.1} parent=51 // pred_check_branch
          %418 = sbr.rel (%p416) target = $region56
        $region55: #{tpu_custom_call.1} parent=51 // pred_region
          %p419 = scmp.lt.s32.totalorder %s20, 1
          %s420 = scalar_select %p419, %s20, 1
          %s421 = smul.addr %s420, 4
          %s422 = smul.addr %s421, 8
          %s423 = scalar_lea.vmem %s3, %s422
        $region56: #{tpu_custom_call.1} parent=51 // pred_fallthru
          _
      $region52: #{tpu_custom_call.1} parent=5 // pred_fallthru
        _
    $region6: #{tpu_custom_call.1} parent=1 // loop_footer
      %s18 = sadd.s32 1, %s14
    $region7: #{tpu_custom_call.1} parent=1 // loop_footer_branch
      %13 = sbr.rel target = $region3
    $region8: #{tpu_custom_call.1} parent=1 // loop_exit
      _
    %424 = vsyncpa [#allocation3], 1
    %s425 = scalar_lea.sflag [#allocation3], 1
    %426 = vsyncpa %s425, 1
    %427 = vsyncpa [#allocation4], 1
    %s428 = scalar_lea.sflag [#allocation4], 1
    %429 = vsyncpa %s428, 1
    %430 = vsyncpa [#allocation7], 1

</llo_original>
